<compile_context>
chip_gen: v5e
topology: v5e:2x2
jax: 0.10.0
libtpu: 0.0.40
codegen_flags: <defaults>
</compile_context>

<pallas_src>
import functools

import jax
import jax.numpy as jnp
from jax import lax
from jax.experimental import pallas as pl
from jax.experimental.pallas import tpu as pltpu

EPS = 1e-5  # PyTorch GroupNorm default
LANE = 128


def _converter_kernel(x_ref, w_ref, gmat_ref, gamma_ref, beta_ref, o_ref, *,
                      group_elems):
    # x_ref:     (C_in,  HW_pad)  bf16 (zero-padded lanes)
    # w_ref:     (C_blk, C_in)    bf16, 1x1 conv weight rows for this block
    # gmat_ref:  (C_blk, C_blk)   f32, [i,j] = 1 iff channels i and j share a group
    # gamma_ref: (C_blk, 1), beta_ref: (C_blk, 1)   f32
    # o_ref:     (C_blk, HW_pad)  bf16
    y = jnp.dot(w_ref[...], x_ref[...],
                preferred_element_type=jnp.float32)               # (C_blk, HW_pad)

    # Padded lanes are exact zeros (x was zero-padded), so plain lane reduces
    # give the valid-lane statistics; divide by the true element count.
    ch_sum = jnp.sum(y, axis=-1, keepdims=True)                   # (C_blk, 1)
    ch_sq = jnp.sum(y * y, axis=-1, keepdims=True)                # (C_blk, 1)

    # Per-channel group sums in one tiny group-membership matmul.
    stats = jnp.concatenate([ch_sum, ch_sq], axis=-1)             # (C_blk, 2)
    gstats = jnp.dot(gmat_ref[...], stats,
                     preferred_element_type=jnp.float32)          # (C_blk, 2)

    mean = gstats[:, 0:1] / group_elems                           # (C_blk, 1)
    var = jnp.maximum(gstats[:, 1:2] / group_elems - mean * mean, 0.0)
    inv = lax.rsqrt(var + EPS)                                    # (C_blk, 1)

    # Fold the GroupNorm affine into one per-channel scale/bias.
    scale = inv * gamma_ref[...]                                  # (C_blk, 1)
    bias = beta_ref[...] - mean * scale                           # (C_blk, 1)

    # 2-op epilogue + ReLU, lane-dense bf16 store.
    o_ref[...] = jnp.maximum(y * scale + bias, 0.0).astype(o_ref.dtype)


def _round_up(x, m):
    return (x + m - 1) // m * m


def _pick_channel_block(c_out, cpg, max_block):
    """Largest channel block that covers whole groups, divides C_out, is
    sublane-aligned (multiple of 8) when it splits C_out, and fits max_block."""
    if c_out <= max_block:
        return c_out
    cands = [blk for blk in range(cpg, c_out + 1, cpg)
             if c_out % blk == 0 and blk % 8 == 0 and blk <= max_block]
    return max(cands) if cands else c_out


@functools.partial(jax.jit, static_argnums=(4, 5))
def converter_branch(x_nchw, weight, gamma, beta, num_groups,
                     max_channel_block=128):
    """Conv2d(1x1, no bias) + GroupNorm + ReLU for one Converter branch."""
    N, C_in, H, W = x_nchw.shape
    C_out = weight.shape[0]
    assert C_out % num_groups == 0, "GroupNorm requires C_out % num_groups == 0"
    cpg = C_out // num_groups
    HW = H * W
    HW_pad = _round_up(HW, LANE)

    C_blk = _pick_channel_block(C_out, cpg, max_channel_block)
    n_cblk = C_out // C_blk

    # NCHW -> (N, C_in, HW_pad): fold spatial onto lanes, zero-pad to 128.
    x = x_nchw.reshape(N, C_in, HW).astype(jnp.bfloat16)
    if HW_pad != HW:
        x = jnp.pad(x, ((0, 0), (0, 0), (0, HW_pad - HW)))
    w = weight.astype(jnp.bfloat16)

    # Group-membership matrix for one channel block (every block has the same
    # internal layout because blocks cover whole, contiguous groups).
    ch_group = jnp.arange(C_blk) // cpg
    gmat = (ch_group[:, None] == ch_group[None, :]).astype(jnp.float32)

    gamma2 = gamma.reshape(C_out, 1).astype(jnp.float32)
    beta2 = beta.reshape(C_out, 1).astype(jnp.float32)

    kernel = functools.partial(_converter_kernel, group_elems=float(cpg * HW))

    cost = pl.CostEstimate(
        flops=int(2 * N * C_out * C_in * HW_pad + 8 * N * C_out * HW_pad
                  + 4 * N * C_out * C_blk),
        transcendentals=int(N * C_out),
        bytes_accessed=int(2 * N * HW_pad * (C_in + C_out) + 2 * C_out * C_in
                           + 4 * (C_blk * C_blk + 2 * C_out)),
    )

    out = pl.pallas_call(
        kernel,
        out_shape=jax.ShapeDtypeStruct((N, C_out, HW_pad), jnp.bfloat16),
        grid_spec=pltpu.PrefetchScalarGridSpec(
            num_scalar_prefetch=0,
            grid=(N, n_cblk),
            in_specs=[
                pl.BlockSpec((None, C_in, HW_pad), lambda n, c: (n, 0, 0)),
                pl.BlockSpec((C_blk, C_in), lambda n, c: (c, 0)),
                pl.BlockSpec((C_blk, C_blk), lambda n, c: (0, 0)),
                pl.BlockSpec((C_blk, 1), lambda n, c: (c, 0)),
                pl.BlockSpec((C_blk, 1), lambda n, c: (c, 0)),
            ],
            out_specs=pl.BlockSpec((None, C_blk, HW_pad),
                                   lambda n, c: (n, c, 0)),
        ),
        compiler_params=pltpu.CompilerParams(
            dimension_semantics=("parallel", "parallel"),
            vmem_limit_bytes=32 * 1024 * 1024,
        ),
        cost_estimate=cost,
    )(x, w, gmat, gamma2, beta2)

    if HW_pad != HW:
        out = out[:, :, :HW]
    return out.reshape(N, C_out, H, W)


def converter_forward(xs, params):
    """xs: list of NCHW arrays; params: list of
    (weight, gamma, beta, num_groups[, max_channel_block])."""
    return [converter_branch(x, *p) for x, p in zip(xs, params)]


def _gn_groups(planes, channel_per_group=4, max_groups=32):
    return min(planes // channel_per_group, max_groups)


def _ref_branch(x, w, gamma, beta, groups, *_):
    """Pure-JAX reference: Conv2d(1x1, no bias) + GroupNorm + ReLU (bf16 I/O rounded)."""
    N, C_in, H, W = x.shape
    C_out = w.shape[0]
    xb = x.astype(jnp.bfloat16).astype(jnp.float32)
    wb = w.astype(jnp.bfloat16).astype(jnp.float32)
    y = jnp.einsum("oc,nchw->nohw", wb, xb)
    yg = y.reshape(N, groups, C_out // groups, H, W)
    mean = yg.mean(axis=(2, 3, 4), keepdims=True)
    var = ((yg - mean) ** 2).mean(axis=(2, 3, 4), keepdims=True)
    yn = ((yg - mean) / jnp.sqrt(var + EPS)).reshape(N, C_out, H, W)
    out = yn * gamma[None, :, None, None] + beta[None, :, None, None]
    return jnp.maximum(out, 0.0)


if __name__ == "__main__":
    # Small Converter config (same structure as config['converter'], scaled down):
    #   branch 0: Conv 4->8,   GN(2, 8),   16x16  (HW=256: lane-dense, no pad)
    #   branch 1: Conv 8->16,  GN(4, 16),  8x8    (HW=64 -> padded to 128 lanes)
    #   branch 2: Conv 16->64, GN(16, 64), 8x8    (channel block 32 -> 2x2 grid)
    batch = 2
    branches = [
        dict(c_in=4, c_out=8, hw=(16, 16), max_blk=128),
        dict(c_in=8, c_out=16, hw=(8, 8), max_blk=128),
        dict(c_in=16, c_out=64, hw=(8, 8), max_blk=32),
    ]

    key = jax.random.PRNGKey(0)
    xs, params = [], []
    for b in branches:
        key, k_x, k_w, k_g, k_b = jax.random.split(key, 5)
        h, w_sp = b["hw"]
        x = jax.random.normal(k_x, (batch, b["c_in"], h, w_sp), dtype=jnp.float32)
        weight = 0.1 * jax.random.normal(k_w, (b["c_out"], b["c_in"]), dtype=jnp.float32)
        gamma = 1.0 + 0.1 * jax.random.normal(k_g, (b["c_out"],), dtype=jnp.float32)
        beta = 0.05 * jax.random.normal(k_b, (b["c_out"],), dtype=jnp.float32)
        xs.append(x)
        params.append((weight, gamma, beta, _gn_groups(b["c_out"]), b["max_blk"]))

    outs = converter_forward(xs, params)
    outs = [jax.block_until_ready(o) for o in outs]

    # correctness check against pure-JAX reference (bf16 I/O tolerance)
    for x, p, o in zip(xs, params, outs):
        ref = _ref_branch(x, *p)
        assert o.shape == ref.shape, (o.shape, ref.shape)
        err = float(jnp.max(jnp.abs(o.astype(jnp.float32) - ref)))
        assert err < 4e-2, f"mismatch vs reference: {err}"

    print("KERNEL_OK")
</pallas_src>

<mosaic_0001>
module attributes {stable_mosaic.version = 11 : i64} {
  func.func @_converter_kernel(%arg0: i32, %arg1: i32, %arg2: memref<1x4x256xbf16, #tpu.memory_space<vmem>>, %arg3: memref<8x4xbf16, #tpu.memory_space<vmem>>, %arg4: memref<8x8xf32, #tpu.memory_space<vmem>>, %arg5: memref<8x1xf32, #tpu.memory_space<vmem>>, %arg6: memref<8x1xf32, #tpu.memory_space<vmem>>, %arg7: memref<1x8x256xbf16, #tpu.memory_space<vmem>>) attributes {dimension_semantics = [#tpu.dimension_semantics<parallel>, #tpu.dimension_semantics<parallel>], iteration_bounds = array<i64: 2, 1>, scalar_prefetch = 0 : i64, scratch_operands = 0 : i64, tpu.core_type = #tpu.core_type<tc>, window_params = [{transform_indices = @transform_0, window_bounds = array<i64: 1, 4, 256>}, {transform_indices = @transform_1, window_bounds = array<i64: 8, 4>}, {pipeline_mode = #tpu.pipeline_mode<synchronous>, transform_indices = @transform_2, window_bounds = array<i64: 8, 8>}, {transform_indices = @transform_3, window_bounds = array<i64: 8, 1>}, {transform_indices = @transform_4, window_bounds = array<i64: 8, 1>}, {transform_indices = @transform_5, window_bounds = array<i64: 1, 8, 256>}]} {
    %c0 = arith.constant 0 : index
    %c0_0 = arith.constant 0 : index
    %0 = vector.load %arg3[%c0, %c0_0] : memref<8x4xbf16, #tpu.memory_space<vmem>>, vector<8x4xbf16>
    %c0_1 = arith.constant 0 : index
    %c0_2 = arith.constant 0 : index
    %c0_3 = arith.constant 0 : index
    %1 = vector.load %arg2[%c0_1, %c0_2, %c0_3] : memref<1x4x256xbf16, #tpu.memory_space<vmem>>, vector<1x4x256xbf16>
    %2 = vector.shape_cast %1 : vector<1x4x256xbf16> to vector<4x256xbf16>
    %cst = arith.constant dense<0.000000e+00> : vector<8x256xf32>
    %3 = tpu.matmul %0, %2, %cst {dimension_numbers = #tpu.dot_dimension_numbers<[1], [0], [0], [1], [0, 0, 1, 1], [], []>} : vector<8x4xbf16>, vector<4x256xbf16>, vector<8x256xf32> -> vector<8x256xf32>
    %cst_4 = arith.constant dense<0.000000e+00> : vector<8xf32>
    %4 = vector.multi_reduction <add>, %3, %cst_4 [1] : vector<8x256xf32> to vector<8xf32>
    %5 = vector.shape_cast %4 : vector<8xf32> to vector<8x1xf32>
    %6 = arith.mulf %3, %3 : vector<8x256xf32>
    %cst_5 = arith.constant dense<0.000000e+00> : vector<8xf32>
    %7 = vector.multi_reduction <add>, %6, %cst_5 [1] : vector<8x256xf32> to vector<8xf32>
    %8 = vector.shape_cast %7 : vector<8xf32> to vector<8x1xf32>
    %9 = tpu.concatenate %5, %8 in 1 : vector<8x1xf32>, vector<8x1xf32> -> vector<8x2xf32>
    %c0_6 = arith.constant 0 : index
    %c0_7 = arith.constant 0 : index
    %10 = vector.load %arg4[%c0_6, %c0_7] : memref<8x8xf32, #tpu.memory_space<vmem>>, vector<8x8xf32>
    %cst_8 = arith.constant dense<0.000000e+00> : vector<8x2xf32>
    %11 = tpu.matmul %10, %9, %cst_8 {dimension_numbers = #tpu.dot_dimension_numbers<[1], [0], [0], [1], [0, 0, 1, 1], [], []>} : vector<8x8xf32>, vector<8x2xf32>, vector<8x2xf32> -> vector<8x2xf32>
    %12 = vector.extract_strided_slice %11 {offsets = [0, 0], sizes = [8, 1], strides = [1, 1]} : vector<8x2xf32> to vector<8x1xf32>
    %cst_9 = arith.constant 1.024000e+03 : f32
    %13 = vector.broadcast %cst_9 : f32 to vector<8x1xf32>
    %14 = arith.divf %12, %13 : vector<8x1xf32>
    %15 = vector.extract_strided_slice %11 {offsets = [0, 1], sizes = [8, 1], strides = [1, 1]} : vector<8x2xf32> to vector<8x1xf32>
    %cst_10 = arith.constant 1.024000e+03 : f32
    %16 = vector.broadcast %cst_10 : f32 to vector<8x1xf32>
    %17 = arith.divf %15, %16 : vector<8x1xf32>
    %18 = arith.mulf %14, %14 : vector<8x1xf32>
    %19 = arith.subf %17, %18 : vector<8x1xf32>
    %cst_11 = arith.constant 0.000000e+00 : f32
    %20 = vector.broadcast %cst_11 : f32 to vector<8x1xf32>
    %21 = arith.maximumf %19, %20 : vector<8x1xf32>
    %cst_12 = arith.constant 9.99999974E-6 : f32
    %22 = vector.broadcast %cst_12 : f32 to vector<8x1xf32>
    %23 = arith.addf %21, %22 : vector<8x1xf32>
    %24 = math.rsqrt %23 : vector<8x1xf32>
    %c0_13 = arith.constant 0 : index
    %c0_14 = arith.constant 0 : index
    %25 = vector.load %arg5[%c0_13, %c0_14] : memref<8x1xf32, #tpu.memory_space<vmem>>, vector<8x1xf32>
    %26 = arith.mulf %24, %25 : vector<8x1xf32>
    %c0_15 = arith.constant 0 : index
    %c0_16 = arith.constant 0 : index
    %27 = vector.load %arg6[%c0_15, %c0_16] : memref<8x1xf32, #tpu.memory_space<vmem>>, vector<8x1xf32>
    %28 = arith.mulf %14, %26 : vector<8x1xf32>
    %29 = arith.subf %27, %28 : vector<8x1xf32>
    %30 = vector.broadcast %26 : vector<8x1xf32> to vector<8x256xf32>
    %31 = arith.mulf %3, %30 : vector<8x256xf32>
    %32 = vector.broadcast %29 : vector<8x1xf32> to vector<8x256xf32>
    %33 = arith.addf %31, %32 : vector<8x256xf32>
    %cst_17 = arith.constant 0.000000e+00 : f32
    %34 = vector.broadcast %cst_17 : f32 to vector<8x256xf32>
    %35 = arith.maximumf %33, %34 : vector<8x256xf32>
    %36 = arith.truncf %35 : vector<8x256xf32> to vector<8x256xbf16>
    %c0_18 = arith.constant 0 : index
    %c0_19 = arith.constant 0 : index
    %c0_20 = arith.constant 0 : index
    %37 = vector.load %arg7[%c0_18, %c0_19, %c0_20] : memref<1x8x256xbf16, #tpu.memory_space<vmem>>, vector<1x8x256xbf16>
    %38 = vector.shape_cast %37 : vector<1x8x256xbf16> to vector<8x256xbf16>
    %39 = vector.shape_cast %36 : vector<8x256xbf16> to vector<1x8x256xbf16>
    tpu.vector_store %arg7[%c0_18, %c0_19, %c0_20], %39 {strides = array<i32>} : memref<1x8x256xbf16, #tpu.memory_space<vmem>>, vector<1x8x256xbf16>,
    return
  }
  func.func @transform_0(%arg0: i32, %arg1: i32) -> (i32, i32, i32) {
    %c0_i32 = arith.constant 0 : i32
    %c0_i32_0 = arith.constant 0 : i32
    %c0_i32_1 = arith.constant 0 : i32
    return %arg0, %c0_i32, %c0_i32_0 : i32, i32, i32
  }
  func.func @transform_1(%arg0: i32, %arg1: i32) -> (i32, i32) {
    %c0_i32 = arith.constant 0 : i32
    %c0_i32_0 = arith.constant 0 : i32
    return %arg1, %c0_i32 : i32, i32
  }
  func.func @transform_2(%arg0: i32, %arg1: i32) -> (i32, i32) {
    %c0_i32 = arith.constant 0 : i32
    %c0_i32_0 = arith.constant 0 : i32
    %c0_i32_1 = arith.constant 0 : i32
    return %c0_i32, %c0_i32_0 : i32, i32
  }
  func.func @transform_3(%arg0: i32, %arg1: i32) -> (i32, i32) {
    %c0_i32 = arith.constant 0 : i32
    %c0_i32_0 = arith.constant 0 : i32
    return %arg1, %c0_i32 : i32, i32
  }
  func.func @transform_4(%arg0: i32, %arg1: i32) -> (i32, i32) {
    %c0_i32 = arith.constant 0 : i32
    %c0_i32_0 = arith.constant 0 : i32
    return %arg1, %c0_i32 : i32, i32
  }
  func.func @transform_5(%arg0: i32, %arg1: i32) -> (i32, i32, i32) {
    %c0_i32 = arith.constant 0 : i32
    %c0_i32_0 = arith.constant 0 : i32
    return %arg0, %arg1, %c0_i32 : i32, i32, i32
  }
}

</mosaic_0001>

<llo_original>
// kernel: converter_branch.1
$region0: #{converter_branch.1}
  #allocation0 [shape = 'u32[]', space=smem, size = 0x4, offset = 0x4, fixed_abs, tag = 'smem constant byte address 0x4 - core index']
  #allocation1 [shape = 'u32[72,128]{1,0:T(1,128)}', space=vmem, size = 0x9000, scoped, tag = 'internal scratch']
  %s0 = inlined_call_operand.vmem [shape: bf16[2,4,256], index: 0, kind: input, shape index: {}]
  %s1 = inlined_call_operand.vmem [shape: bf16[8,4], index: 1, kind: input, shape index: {}]
  %s2 = inlined_call_operand.vmem [shape: f32[8,8], index: 2, kind: input, shape index: {}]
  %s3 = inlined_call_operand.vmem [shape: f32[8,1], index: 3, kind: input, shape index: {}]
  %s4 = inlined_call_operand.vmem [shape: f32[8,1], index: 4, kind: input, shape index: {}]
  %s5 = inlined_call_operand.vmem [shape: bf16[2,8,256], index: 5, kind: output, shape index: {}]
  %s6 = sld [smem:[#allocation0]]
  $region53: #{converter_branch.1} parent=0
    _
  %s8 = ssub.s32 1, %s6
  %s9 = scalar_select 0, %s8, %s6
  loop: start=0, step=1, limit=4
  $region2: #{converter_branch.1} parent=0 // loop_pre_header
    _
  $region3: #{converter_branch.1} parent=0 // loop_header
    %s11 = sphi 0, %s15
    %p12 = scmp.ge.s32.totalorder %s11, 4
    %s18 = sphi 0, %s30
    %s19 = sphi 0, %s26
    %s20 = sphi 0, %s18
    %s21 = sphi 0, %s19
    %s22 = sphi 0, %s20
    %s23 = sphi 0, %s21
    %s33 = sphi 0, %s35
    %s36 = sphi 0, %s33
    %s37 = sphi 0, %s36
    %s53 = sphi 0, %s37
    %s59 = sphi 0, %s61
    %s62 = sphi 0, %s59
    %s63 = sphi 0, %s62
    %s79 = sphi 0, %s63
    %s83 = sphi 0, %s83
    %s85 = sphi 0, %s83
    %s86 = sphi 0, %s85
    %s100 = sphi 0, %s86
    %s106 = sphi 0, %s108
    %s109 = sphi 0, %s106
    %s110 = sphi 0, %s109
    %s126 = sphi 0, %s110
    %s132 = sphi 0, %s134
    %s135 = sphi 0, %s132
    %s136 = sphi 0, %s135
    %s152 = sphi 0, %s136
    %s160 = sphi 0, %s162
    %s163 = sphi 0, %s160
    %s164 = sphi 0, %s163
    %s180 = sphi 0, %s164
  $region4: #{converter_branch.1} parent=0 // loop_header_branch
    %14 = sbr.rel (%p12) target = $region8
  $region5: #{converter_branch.1} parent=0 // loop_body
    %s16 = ssub.s32 %s11, 1
    %s17 = ssub.s32 %s11, 2
    %s24 = sadd.s32 1, %s19
    %p25 = scmp.ge.s32.totalorder %s24, 1
    %s26 = scalar_select %p25, 0, %s24
    %s27 = sadd.s32 1, %s18
    %s28 = scalar_select %p25, %s27, %s18
    %p29 = scmp.ge.s32.totalorder %s28, 2
    %s30 = scalar_select %p29, 0, %s28
    %s31 = ssub.s32 %s18, %s30
    %p32 = scmp.eq.s32.totalorder %s31, 0
    %s34 = sadd.s32 %s33, 1
    %s35 = scalar_select %p32, %s33, %s34
    %p38 = pneg %p32
    %p39 = scmp.eq.s32.totalorder %s11, 1
    %p40 = por %p38, %p39
    %p41 = scmp.ne.s32.totalorder %s33, %s36
    %p42 = scmp.eq.s32.totalorder %s11, 0
    %p43 = por %p41, %p42
    %p44 = scmp.ne.s32.totalorder %s33, %s36
    %p45 = scmp.eq.s32.totalorder %s16, 1
    %p46 = por %p44, %p45
    %p47 = scmp.ne.s32.totalorder %s36, %s37
    %p48 = scmp.eq.s32.totalorder %s16, 0
    %p49 = por %p47, %p48
    %p50 = scmp.ne.s32.totalorder %s36, %s37
    %p51 = scmp.eq.s32.totalorder %s17, 1
    %p52 = por %p50, %p51
    %p54 = scmp.ne.s32.totalorder %s37, %s53
    %p55 = scmp.eq.s32.totalorder %s17, 0
    %p56 = por %p54, %p55
    %s57 = ssub.s32 %s19, %s26
    %p58 = scmp.eq.s32.totalorder %s57, 0
    %s60 = sadd.s32 %s59, 1
    %s61 = scalar_select %p58, %s59, %s60
    %p64 = pneg %p58
    %p65 = scmp.eq.s32.totalorder %s11, 1
    %p66 = por %p64, %p65
    %p67 = scmp.ne.s32.totalorder %s59, %s62
    %p68 = scmp.eq.s32.totalorder %s11, 0
    %p69 = por %p67, %p68
    %p70 = scmp.ne.s32.totalorder %s59, %s62
    %p71 = scmp.eq.s32.totalorder %s16, 1
    %p72 = por %p70, %p71
    %p73 = scmp.ne.s32.totalorder %s62, %s63
    %p74 = scmp.eq.s32.totalorder %s16, 0
    %p75 = por %p73, %p74
    %p76 = scmp.ne.s32.totalorder %s62, %s63
    %p77 = scmp.eq.s32.totalorder %s17, 1
    %p78 = por %p76, %p77
    %p80 = scmp.ne.s32.totalorder %s63, %s79
    %p81 = scmp.eq.s32.totalorder %s17, 0
    %p82 = por %p80, %p81
    %s84 = sadd.s32 %s83, 1
    %p87 = scmp.eq.s32.totalorder %s11, 1
    %p88 = scmp.ne.s32.totalorder %s83, %s85
    %p89 = scmp.eq.s32.totalorder %s11, 0
    %p90 = por %p88, %p89
    %p91 = scmp.ne.s32.totalorder %s83, %s85
    %p92 = scmp.eq.s32.totalorder %s16, 1
    %p93 = por %p91, %p92
    %p94 = scmp.ne.s32.totalorder %s85, %s86
    %p95 = scmp.eq.s32.totalorder %s16, 0
    %p96 = por %p94, %p95
    %p97 = scmp.ne.s32.totalorder %s85, %s86
    %p98 = scmp.eq.s32.totalorder %s17, 1
    %p99 = por %p97, %p98
    %p101 = scmp.ne.s32.totalorder %s86, %s100
    %p102 = scmp.eq.s32.totalorder %s17, 0
    %p103 = por %p101, %p102
    %s104 = ssub.s32 %s19, %s26
    %p105 = scmp.eq.s32.totalorder %s104, 0
    %s107 = sadd.s32 %s106, 1
    %s108 = scalar_select %p105, %s106, %s107
    %p111 = pneg %p105
    %p112 = scmp.eq.s32.totalorder %s11, 1
    %p113 = por %p111, %p112
    %p114 = scmp.ne.s32.totalorder %s106, %s109
    %p115 = scmp.eq.s32.totalorder %s11, 0
    %p116 = por %p114, %p115
    %p117 = scmp.ne.s32.totalorder %s106, %s109
    %p118 = scmp.eq.s32.totalorder %s16, 1
    %p119 = por %p117, %p118
    %p120 = scmp.ne.s32.totalorder %s109, %s110
    %p121 = scmp.eq.s32.totalorder %s16, 0
    %p122 = por %p120, %p121
    %p123 = scmp.ne.s32.totalorder %s109, %s110
    %p124 = scmp.eq.s32.totalorder %s17, 1
    %p125 = por %p123, %p124
    %p127 = scmp.ne.s32.totalorder %s110, %s126
    %p128 = scmp.eq.s32.totalorder %s17, 0
    %p129 = por %p127, %p128
    %s130 = ssub.s32 %s19, %s26
    %p131 = scmp.eq.s32.totalorder %s130, 0
    %s133 = sadd.s32 %s132, 1
    %s134 = scalar_select %p131, %s132, %s133
    %p137 = pneg %p131
    %p138 = scmp.eq.s32.totalorder %s11, 1
    %p139 = por %p137, %p138
    %p140 = scmp.ne.s32.totalorder %s132, %s135
    %p141 = scmp.eq.s32.totalorder %s11, 0
    %p142 = por %p140, %p141
    %p143 = scmp.ne.s32.totalorder %s132, %s135
    %p144 = scmp.eq.s32.totalorder %s16, 1
    %p145 = por %p143, %p144
    %p146 = scmp.ne.s32.totalorder %s135, %s136
    %p147 = scmp.eq.s32.totalorder %s16, 0
    %p148 = por %p146, %p147
    %p149 = scmp.ne.s32.totalorder %s135, %s136
    %p150 = scmp.eq.s32.totalorder %s17, 1
    %p151 = por %p149, %p150
    %p153 = scmp.ne.s32.totalorder %s136, %s152
    %p154 = scmp.eq.s32.totalorder %s17, 0
    %p155 = por %p153, %p154
    %s156 = ssub.s32 %s18, %s30
    %s157 = ssub.s32 %s19, %s26
    %s158 = sor.u32 %s156, %s157
    %p159 = scmp.eq.s32.totalorder %s158, 0
    %s161 = sadd.s32 %s160, 1
    %s162 = scalar_select %p159, %s160, %s161
    %p165 = pneg %p159
    %p166 = scmp.eq.s32.totalorder %s11, 1
    %p167 = por %p165, %p166
    %p168 = scmp.ne.s32.totalorder %s160, %s163
    %p169 = scmp.eq.s32.totalorder %s11, 0
    %p170 = por %p168, %p169
    %p171 = scmp.ne.s32.totalorder %s160, %s163
    %p172 = scmp.eq.s32.totalorder %s16, 1
    %p173 = por %p171, %p172
    %p174 = scmp.ne.s32.totalorder %s163, %s164
    %p175 = scmp.eq.s32.totalorder %s16, 0
    %p176 = por %p174, %p175
    %p177 = scmp.ne.s32.totalorder %s163, %s164
    %p178 = scmp.eq.s32.totalorder %s17, 1
    %p179 = por %p177, %p178
    %p181 = scmp.ne.s32.totalorder %s164, %s180
    %p182 = scmp.eq.s32.totalorder %s17, 0
    %p183 = por %p181, %p182
    %p184 = scmp.le.s32.totalorder 1, %s11
    %p185 = scmp.lt.s32.totalorder %s11, 3
    %p186 = pnand %p184, %p185
    %p187 = pneg %p186
    // Predicated region
    $region9: #{converter_branch.1} parent=5 // pred_check
      _
    $region10: #{converter_branch.1} parent=5 // pred_check_branch
      %189 = sbr.rel (%p186) target = $region12
    $region11: #{converter_branch.1} parent=5 // pred_region
      %s190 = ssub.s32 %s11, 1
      // Predicated region
      $region13: #{converter_branch.1} parent=11 // pred_check
        %p191 = pneg %p75
      $region14: #{converter_branch.1} parent=11 // pred_check_branch
        %193 = sbr.rel (%p191) target = $region16
      $region15: #{converter_branch.1} parent=11 // pred_region
        %p194 = scmp.lt.s32.totalorder %s21, 0
        %s195 = scalar_select %p194, %s21, 0
        %s196 = smul.addr %s195, 4
        %s197 = scalar_lea.vmem %s1, %s196
      $region16: #{converter_branch.1} parent=11 // pred_fallthru
        _
      // Predicated region
      $region17: #{converter_branch.1} parent=11 // pred_check
        %p198 = pneg %p96
      $region18: #{converter_branch.1} parent=11 // pred_check_branch
        %200 = sbr.rel (%p198) target = $region20
      $region19: #{converter_branch.1} parent=11 // pred_region
        _
      $region20: #{converter_branch.1} parent=11 // pred_fallthru
        _
      // Predicated region
      $region21: #{converter_branch.1} parent=11 // pred_check
        %p201 = pneg %p122
      $region22: #{converter_branch.1} parent=11 // pred_check_branch
        %203 = sbr.rel (%p201) target = $region24
      $region23: #{converter_branch.1} parent=11 // pred_region
        %p204 = scmp.lt.s32.totalorder %s21, 0
        %s205 = scalar_select %p204, %s21, 0
        %s206 = smul.addr %s205, 8
        %s207 = scalar_lea.vmem %s3, %s206
      $region24: #{converter_branch.1} parent=11 // pred_fallthru
        _
      // Predicated region
      $region25: #{converter_branch.1} parent=11 // pred_check
        %p208 = pneg %p148
      $region26: #{converter_branch.1} parent=11 // pred_check_branch
        %210 = sbr.rel (%p208) target = $region28
      $region27: #{converter_branch.1} parent=11 // pred_region
        %p211 = scmp.lt.s32.totalorder %s21, 0
        %s212 = scalar_select %p211, %s21, 0
        %s213 = smul.addr %s212, 8
        %s214 = scalar_lea.vmem %s4, %s213
      $region28: #{converter_branch.1} parent=11 // pred_fallthru
        _
    $region12: #{converter_branch.1} parent=5 // pred_fallthru
      _
    %p215 = scmp.lt.s32.totalorder %s11, 2
    // Predicated region
    $region29: #{converter_branch.1} parent=5 // pred_check
      %p216 = pneg %p215
    $region30: #{converter_branch.1} parent=5 // pred_check_branch
      %218 = sbr.rel (%p216) target = $region32
    $region31: #{converter_branch.1} parent=5 // pred_region
      // Predicated region
      $region33: #{converter_branch.1} parent=31 // pred_check
        %p219 = pneg %p43
      $region34: #{converter_branch.1} parent=31 // pred_check_branch
        %221 = sbr.rel (%p219) target = $region36
      $region35: #{converter_branch.1} parent=31 // pred_region
        %p222 = scmp.lt.s32.totalorder %s18, 1
        %s223 = scalar_select %p222, %s18, 1
        %s224 = smul.addr %s223, 2
        %s225 = smul.addr %s224, 2
        %s226 = scalar_lea.vmem %s0, %s225
      $region36: #{converter_branch.1} parent=31 // pred_fallthru
        _
    $region32: #{converter_branch.1} parent=5 // pred_fallthru
      _
    %p227 = scmp.le.s32.totalorder 1, %s11
    %p228 = scmp.lt.s32.totalorder %s11, 3
    %p229 = pnand %p227, %p228
    %p230 = pneg %p229
    // Predicated region
    $region37: #{converter_branch.1} parent=5 // pred_check
      _
    $region38: #{converter_branch.1} parent=5 // pred_check_branch
      %232 = sbr.rel (%p229) target = $region40
    $region39: #{converter_branch.1} parent=5 // pred_region
      %s233 = ssub.s32 %s11, 1
      %p234 = scmp.lt.s32.totalorder %s20, 1
      %s235 = scalar_select %p234, %s20, 1
      %s236 = smul.addr %s235, 2
      %s237 = smul.addr %s236, 2
      %s238 = scalar_lea.vmem %s0, %s237
      %p239 = pneg %p49
      %p240 = pneg %p46
      %p241 = scmp.lt.s32.totalorder %s21, 0
      %s242 = scalar_select %p241, %s21, 0
      %s243 = smul.addr %s242, 4
      %s244 = scalar_lea.vmem %s1, %s243
      %p245 = pneg %p75
      %p246 = pneg %p72
      %p247 = pneg %p96
      %p248 = pneg %p93
      %p249 = scmp.lt.s32.totalorder %s21, 0
      %s250 = scalar_select %p249, %s21, 0
      %s251 = smul.addr %s250, 8
      %s252 = scalar_lea.vmem %s3, %s251
      %p253 = pneg %p122
      %p254 = pneg %p119
      %p255 = scmp.lt.s32.totalorder %s21, 0
      %s256 = scalar_select %p255, %s21, 0
      %s257 = smul.addr %s256, 8
      %s258 = scalar_lea.vmem %s4, %s257
      %p259 = pneg %p148
      %p260 = pneg %p145
      %p261 = pneg %p176
      %p262 = pneg %p173
      %p263 = scmp.lt.s32.totalorder %s20, 1
      %s264 = scalar_select %p263, %s20, 1
      %p265 = scmp.lt.s32.totalorder %s21, 0
      %s266 = scalar_select %p265, %s21, 0
      %s267 = smul.addr %s266, 2
      %s268 = smul.addr %s264, 2
      %s269 = sadd.s32 %s267, %s268
      %s270 = smul.addr %s269, 4
      %s271 = scalar_lea.vmem %s5, %s270
      %p272 = scmp.lt.s32.totalorder %s20, 1
      %s273 = scalar_select %p272, %s20, 1
      %s274 = smul.addr %s273, 2
      %s275 = smul.addr %s274, 2
      %s276 = scalar_lea.vmem %s0, %s275
      %p277 = scmp.lt.s32.totalorder %s21, 0
      %s278 = scalar_select %p277, %s21, 0
      %s279 = smul.addr %s278, 4
      %s280 = scalar_lea.vmem %s1, %s279
      %p281 = scmp.lt.s32.totalorder %s21, 0
      %s282 = scalar_select %p281, %s21, 0
      %s283 = smul.addr %s282, 8
      %s284 = scalar_lea.vmem %s3, %s283
      %p285 = scmp.lt.s32.totalorder %s21, 0
      %s286 = scalar_select %p285, %s21, 0
      %s287 = smul.addr %s286, 8
      %s288 = scalar_lea.vmem %s4, %s287
      %p289 = scmp.lt.s32.totalorder %s20, 1
      %s290 = scalar_select %p289, %s20, 1
      %p291 = scmp.lt.s32.totalorder %s21, 0
      %s292 = scalar_select %p291, %s21, 0
      %s293 = smul.addr %s292, 2
      %s294 = smul.addr %s290, 2
      %s295 = sadd.s32 %s293, %s294
      %s296 = smul.addr %s295, 4
      %s297 = scalar_lea.vmem %s5, %s296
      %v299 = vld [vmem:[%s280] sm:$0xf]
      %v300 = vld [vmem:[%s276] sm:$0xf]
      %302 = vst [vmem:[#allocation1] ss:$4 sm:$0xff] %v300
      %v303 = vld.sshfl [vmem:[#allocation1] sm:$0xff pattern:$0x73625140]
      %v304 = vld.sshfl [vmem:[#allocation1 + $0x8] sm:$0xff pattern:$0x73625140]
      %vm305 = vcmask 31744
      %v307 = vsel %vm305, %v299, 0
      %vm309 = vcmask 1041408
      %v310 = vsel %vm309, %v303, 0
      %v312 = vsel %vm309, %v304, 0
      %314 = vmatpush.bf16.msra.mxu0 0
      %315 = vmatpush.bf16.msra.mxu0 0
      %316 = vmatpush.bf16.msra.mxu0 0
      %317 = vmatpush.bf16.msra.mxu0 0
      %318 = vmatpush.bf16.msra.mxu0 0
      %319 = vmatpush.bf16.msra.mxu0 0
      %320 = vmatpush.bf16.msra.mxu0 0
      %321 = vmatpush.bf16.msra.mxu0 %v310
      %322 = vmatmul.bf16.gmra.mxu0 %v307
      %v323 = vpop.f32.mrf.mxu0
      %v324 = vadd.f32 0.0, %v323
      %v325 = vpop.f32.mrf.mxu0
      %326 = vdwg.mxu0
      %327 = vmatpush.bf16.msra.mxu0 0
      %328 = vmatpush.bf16.msra.mxu0 0
      %329 = vmatpush.bf16.msra.mxu0 0
      %330 = vmatpush.bf16.msra.mxu0 0
      %331 = vmatpush.bf16.msra.mxu0 0
      %332 = vmatpush.bf16.msra.mxu0 0
      %333 = vmatpush.bf16.msra.mxu0 0
      %334 = vmatpush.bf16.msra.mxu0 %v312
      %335 = vmatmul.bf16.gmra.mxu0 %v307
      %v336 = vpop.f32.mrf.mxu0
      %v337 = vadd.f32 0.0, %v336
      %v338 = vpop.f32.mrf.mxu0
      %339 = vdwg.mxu0
      %v340 = vadd.f32 %v324, %v337
      %341 = vadd.xlane.f32.xlu0 %v340
      %v342 = vpop.xlane.xlu0 %341
      %v343 = vmul.f32 %v324, %v324
      %v344 = vmul.f32 %v337, %v337
      %v345 = vadd.f32 %v343, %v344
      %346 = vadd.xlane.f32.xlu0 %v345
      %v347 = vpop.xlane.xlu0 %346
      %vm348 = vcmask 7168
      %v349 = vsel %vm348, %v342, %v347
      %v350 = vld [vmem:[%s2] sm:$0xff]
      %vm351 = vcmask 64512
      %v353 = vsel %vm351, %v350, 0
      %355 = vmatpush.msra.mxu0 0.0
      %356 = vmatpush.msra.mxu0 0.0
      %357 = vmatpush.msra.mxu0 0.0
      %358 = vmatpush.msra.mxu0 0.0
      %359 = vmatpush.msra.mxu0 0.0
      %360 = vmatpush.msra.mxu0 0.0
      %361 = vmatpush.msra.mxu0 0.0
      %362 = vmatpush.msra.mxu0 0.0
      %363 = vmatpush.msra.mxu0 0.0
      %364 = vmatpush.msra.mxu0 0.0
      %365 = vmatpush.msra.mxu0 0.0
      %366 = vmatpush.msra.mxu0 0.0
      %367 = vmatpush.msra.mxu0 0.0
      %368 = vmatpush.msra.mxu0 0.0
      %369 = vmatpush.msra.mxu0 0.0
      %370 = vmatpush.msra.mxu0 %v349
      %371 = vmatmul.f32.gmra.mxu0 %v353
      %v372 = vpop.f32.mrf.mxu0
      %v373 = vadd.f32 0.0, %v372
      %374 = vdwg.mxu0
      %v375 = vrcp.pop 1024.0
      %v376 = vmul.f32 1024.0, %v375
      %v377 = vsub.f32 1.0, %v376
      %v378 = vmul.f32 %v375, %v377
      %v379 = vadd.f32 %v375, %v378
      %vm380 = vweird.f32 %v375
      %v381 = vsel %vm380, %v375, %v379
      %v382 = vmul.f32 %v373, %v381
      %v383 = vmul.f32 %v382, %v382
      %385 = vrot.lane.b32.xlu0 %v383, 1
      %v386 = vpop.permute.xlu0 %385
      %v388 = vsub.f32 %v382, %v386
      %v389 = vmax.f32 %v388, 0.0
      %v390 = vadd.f32 %v389, 1e-05
      %v391 = vrsqrt.pop %v390
      %v392 = vmul.f32 %v391, %v390
      %v393 = vmul.f32 %v392, %v391
      %v394 = vmul.f32 0.5, %v393
      %v395 = vsub.f32 1.5, %v394
      %v396 = vmul.f32 %v391, %v395
      %vm397 = vweird.f32 %v390
      %vm398 = vweird.f32 %v391
      %vm399 = vmor %vm397, %vm398
      %v400 = vsel %vm399, %v391, %v396
      %v401 = vld [vmem:[%s284] sm:$0xff]
      %403 = vrot.lane.b32.xlu0 %v401, 1
      %v404 = vpop.permute.xlu0 %403
      %v406 = vmul.f32 %v400, %v404
      %v407 = vld [vmem:[%s288] sm:$0xff]
      %409 = vrot.lane.b32.xlu0 %v406, 127
      %v410 = vpop.permute.xlu0 %409
      %v412 = vmul.f32 %v382, %v410
      %v413 = vsub.f32 %v407, %v412
      %414 = vset.pattern.permute.xlu0 1
      %415 = vperm.xlu0 %414, %v406
      %v416 = vpop.permute.xlu0 %415
      %v418 = vmul.f32 %v324, %v416
      %v419 = vmul.f32 %v337, %v416
      %421 = vset.pattern.permute.xlu0 0
      %422 = vperm.xlu0 %421, %v413
      %v423 = vpop.permute.xlu0 %422
      %v425 = vadd.f32 %v418, %v423
      %v426 = vadd.f32 %v419, %v423
      %v427 = vmax.f32 %v425, 0.0
      %v428 = vmax.f32 %v426, 0.0
      %v429 = vpack.c.bf16 %v428, %v427
      %430 = vst [vmem:[%s297] sm:$0xff] %v429
      %p431 = scmp.lt.s32.totalorder %s20, 1
      %s432 = scalar_select %p431, %s20, 1
      %p433 = scmp.lt.s32.totalorder %s21, 0
      %s434 = scalar_select %p433, %s21, 0
      %s435 = smul.addr %s434, 2
      %s436 = smul.addr %s432, 2
      %s437 = sadd.s32 %s435, %s436
      %s438 = smul.addr %s437, 4
      %s439 = scalar_lea.vmem %s5, %s438
      // Predicated region
      $region41: #{converter_branch.1} parent=39 // pred_check
        %p440 = pneg %p173
      $region42: #{converter_branch.1} parent=39 // pred_check_branch
        %442 = sbr.rel (%p440) target = $region44
      $region43: #{converter_branch.1} parent=39 // pred_region
        _
      $region44: #{converter_branch.1} parent=39 // pred_fallthru
        _
    $region40: #{converter_branch.1} parent=5 // pred_fallthru
      _
    %p443 = scmp.le.s32.totalorder 2, %s11
    // Predicated region
    $region45: #{converter_branch.1} parent=5 // pred_check
      %p444 = pneg %p443
    $region46: #{converter_branch.1} parent=5 // pred_check_branch
      %446 = sbr.rel (%p444) target = $region48
    $region47: #{converter_branch.1} parent=5 // pred_region
      %s447 = ssub.s32 %s11, 2
      // Predicated region
      $region49: #{converter_branch.1} parent=47 // pred_check
        %p448 = pneg %p179
      $region50: #{converter_branch.1} parent=47 // pred_check_branch
        %450 = sbr.rel (%p448) target = $region52
      $region51: #{converter_branch.1} parent=47 // pred_region
        %p451 = scmp.lt.s32.totalorder %s22, 1
        %s452 = scalar_select %p451, %s22, 1
        %p453 = scmp.lt.s32.totalorder %s23, 0
        %s454 = scalar_select %p453, %s23, 0
        %s455 = smul.addr %s454, 2
        %s456 = smul.addr %s452, 2
        %s457 = sadd.s32 %s455, %s456
        %s458 = smul.addr %s457, 4
        %s459 = scalar_lea.vmem %s5, %s458
      $region52: #{converter_branch.1} parent=47 // pred_fallthru
        _
    $region48: #{converter_branch.1} parent=5 // pred_fallthru
      _
  $region6: #{converter_branch.1} parent=0 // loop_footer
    %s15 = sadd.s32 1, %s11
  $region7: #{converter_branch.1} parent=0 // loop_footer_branch
    %10 = sbr.rel target = $region3
  $region8: #{converter_branch.1} parent=0 // loop_exit
    _

</llo_original>
